<compile_context>
chip_gen: v7x
topology: tpu7x:2x2x1
jax: 0.10.0
libtpu: 0.0.40
codegen_flags: <defaults>
</compile_context>

<pallas_src>
import numpy as np
import jax
import jax.numpy as jnp
from jax.experimental import pallas as pl
from jax.experimental.pallas import tpu as pltpu

LANE = 128


def _pad_to(a, target, axis):
    pad = target - a.shape[axis]
    if pad <= 0:
        return a
    widths = [(0, 0)] * a.ndim
    widths[axis] = (0, pad)
    return jnp.pad(a, widths)


def _round_up(n, m):
    return ((n + m - 1) // m) * m


def sbert_cls_kernel(x_ref, pe_ref, w_in_ref, b_in_ref, w_cls_ref, b_cls_ref, out_ref):
    tbL = x_ref.shape[0]
    Hp = w_in_ref.shape[1]
    tb = out_ref.shape[0]
    L = tbL // tb

    # --- SBERT stand-in encoder: embedding projection + positional encoding ---
    # TODO(synk): the SBERT transformer block stack (masked attention + FFN +
    # LayerNorm), where `mask` is consumed, was not provided in the reference.
    h = jnp.dot(x_ref[...], w_in_ref[...],
                preferred_element_type=jnp.float32)              # (tb*L, Hp)  MXU, bf16 in / f32 acc
    h = h + b_in_ref[...] + pe_ref[...].astype(jnp.float32)      # f32 VPU adds (free under MXU/DMA)

    # --- MulticlassClassification head ---
    # MaxPool1d(seq_len) over (B, H, L) == max over the seq axis.  The
    # (tb*L, Hp) -> (tb, L, Hp) reshape only regroups whole (8, 128) sublane
    # tiles (L == 8, Hp == 128), so it is layout-free.  (The PyTorch head
    # ignores `mask` in the pool; semantics preserved.)
    pooled = jnp.max(h.reshape(tb, L, Hp), axis=1)               # (tb, Hp)

    logits = jnp.dot(pooled.astype(jnp.bfloat16), w_cls_ref[...],
                     preferred_element_type=jnp.float32)         # (tb, Cp)  lane-dense
    out_ref[...] = logits + b_cls_ref[...]


def sbert_classification(x, pe, w_in, b_in, w_cls, b_cls, *, tb=8):
    B, L, F = x.shape
    H = w_in.shape[1]
    C = w_cls.shape[1]

    Fp = _round_up(F, LANE)
    Hp = _round_up(H, LANE)
    Cp = _round_up(C, LANE)

    tb = min(tb, B)
    assert B % tb == 0, "batch must be divisible by the batch tile"
    assert (tb * L) % 8 == 0, "rows per block must be sublane-aligned"

    # Wrapper-side layout plumbing: flatten to 2-D, zero-pad lanes, cast to bf16.
    x2 = _pad_to(x.reshape(B * L, F), Fp, 1).astype(jnp.bfloat16)
    pe2 = _pad_to(pe.reshape(B * L, H), Hp, 1).astype(jnp.bfloat16)
    w_in_p = _pad_to(_pad_to(w_in, Hp, 1), Fp, 0).astype(jnp.bfloat16)
    b_in_p = _pad_to(b_in.reshape(1, H), Hp, 1).astype(jnp.float32)
    w_cls_p = _pad_to(_pad_to(w_cls, Cp, 1), Hp, 0).astype(jnp.bfloat16)
    b_cls_p = _pad_to(b_cls.reshape(1, C), Cp, 1).astype(jnp.float32)

    grid = (B // tb,)
    vmem = pltpu.MemorySpace.VMEM

    cost = pl.CostEstimate(
        flops=2 * B * L * Fp * Hp + 2 * B * Hp * Cp,
        transcendentals=0,
        bytes_accessed=(x2.size + pe2.size + w_in_p.size + w_cls_p.size) * 2
                       + (b_in_p.size + b_cls_p.size) * 4 + B * Cp * 4,
    )

    out_padded = pl.pallas_call(
        sbert_cls_kernel,
        out_shape=jax.ShapeDtypeStruct((B, Cp), jnp.float32),
        grid=grid,
        in_specs=[
            pl.BlockSpec((tb * L, Fp), lambda i: (i, 0), memory_space=vmem),  # x block
            pl.BlockSpec((tb * L, Hp), lambda i: (i, 0), memory_space=vmem),  # pe block
            pl.BlockSpec((Fp, Hp), lambda i: (0, 0), memory_space=vmem),      # resident weights
            pl.BlockSpec((1, Hp), lambda i: (0, 0), memory_space=vmem),
            pl.BlockSpec((Hp, Cp), lambda i: (0, 0), memory_space=vmem),
            pl.BlockSpec((1, Cp), lambda i: (0, 0), memory_space=vmem),
        ],
        out_specs=pl.BlockSpec((tb, Cp), lambda i: (i, 0), memory_space=vmem),
        compiler_params=pltpu.CompilerParams(
            dimension_semantics=("parallel",),
        ),
        cost_estimate=cost,
    )(x2, pe2, w_in_p, b_in_p, w_cls_p, b_cls_p)

    return out_padded[:, :C]


def _reference(x, pe, w_in, b_in, w_cls, b_cls):
    h = jnp.einsum("blf,fh->blh", x, w_in) + b_in + pe
    pooled = jnp.max(h, axis=1)
    return pooled @ w_cls + b_cls


if __name__ == "__main__":
    # Small shapes consistent with the module (batch sized to exercise the grid):
    # batch=16, seq_len=8, num_features=10, hidden=32, num_classes=5
    B, L, F, H, C = 16, 8, 10, 32, 5

    key = jax.random.PRNGKey(0)
    k_x, k_doy, k_win, k_wcls = jax.random.split(key, 4)

    x = jax.random.normal(k_x, (B, L, F), dtype=jnp.float32)      # satellite TS input
    doy = jax.random.randint(k_doy, (B, L), 1, 366)               # day-of-year (int)
    mask = jnp.ones((B, L), dtype=jnp.int32)                      # consumed only by the (absent) attention stack

    # Deterministic synthetic parameters (no checkpoint loading).
    w_in = jax.random.normal(k_win, (F, H), dtype=jnp.float32) * (1.0 / np.sqrt(F))
    b_in = jnp.zeros((1, H), dtype=jnp.float32)
    w_cls = jax.random.normal(k_wcls, (H, C), dtype=jnp.float32) * (1.0 / np.sqrt(H))
    b_cls = jnp.zeros((1, C), dtype=jnp.float32)

    # Sinusoidal day-of-year positional-encoding table; the gather is plain-JAX glue.
    pos = np.arange(367, dtype=np.float32)[:, None]
    div = np.exp(np.arange(0, H, 2, dtype=np.float32) * -(np.log(10000.0) / H))
    pe_table = np.zeros((367, H), dtype=np.float32)
    pe_table[:, 0::2] = np.sin(pos * div)
    pe_table[:, 1::2] = np.cos(pos * div)
    pe = jnp.asarray(pe_table)[doy]                               # (B, L, H)

    out = sbert_classification(x, pe, w_in, b_in, w_cls, b_cls, tb=8)
    jax.block_until_ready(out)
    assert out.shape == (B, C) and out.dtype == jnp.float32

    ref = _reference(x, pe, w_in, b_in, w_cls, b_cls)
    np.testing.assert_allclose(np.asarray(out), np.asarray(ref), rtol=5e-2, atol=5e-2)
    print("KERNEL_OK")
</pallas_src>

<mosaic_0001>
module attributes {stable_mosaic.version = 11 : i64} {
  func.func @sbert_cls_kernel(%arg0: i32, %arg1: memref<64x128xbf16, #tpu.memory_space<vmem>>, %arg2: memref<64x128xbf16, #tpu.memory_space<vmem>>, %arg3: memref<128x128xbf16, #tpu.memory_space<vmem>>, %arg4: memref<1x128xf32, #tpu.memory_space<vmem>>, %arg5: memref<128x128xbf16, #tpu.memory_space<vmem>>, %arg6: memref<1x128xf32, #tpu.memory_space<vmem>>, %arg7: memref<8x128xf32, #tpu.memory_space<vmem>>) attributes {dimension_semantics = [#tpu.dimension_semantics<parallel>], iteration_bounds = array<i64: 2>, scalar_prefetch = 0 : i64, scratch_operands = 0 : i64, tpu.core_type = #tpu.core_type<tc>, window_params = [{transform_indices = @transform_0, window_bounds = array<i64: 64, 128>}, {transform_indices = @transform_1, window_bounds = array<i64: 64, 128>}, {pipeline_mode = #tpu.pipeline_mode<synchronous>, transform_indices = @transform_2, window_bounds = array<i64: 128, 128>}, {pipeline_mode = #tpu.pipeline_mode<synchronous>, transform_indices = @transform_3, window_bounds = array<i64: 1, 128>}, {pipeline_mode = #tpu.pipeline_mode<synchronous>, transform_indices = @transform_4, window_bounds = array<i64: 128, 128>}, {pipeline_mode = #tpu.pipeline_mode<synchronous>, transform_indices = @transform_5, window_bounds = array<i64: 1, 128>}, {transform_indices = @transform_6, window_bounds = array<i64: 8, 128>}]} {
    %c0 = arith.constant 0 : index
    %c0_0 = arith.constant 0 : index
    %0 = vector.load %arg1[%c0, %c0_0] : memref<64x128xbf16, #tpu.memory_space<vmem>>, vector<64x128xbf16>
    %c0_1 = arith.constant 0 : index
    %c0_2 = arith.constant 0 : index
    %1 = vector.load %arg3[%c0_1, %c0_2] : memref<128x128xbf16, #tpu.memory_space<vmem>>, vector<128x128xbf16>
    %cst = arith.constant dense<0.000000e+00> : vector<64x128xf32>
    %2 = tpu.matmul %0, %1, %cst {dimension_numbers = #tpu.dot_dimension_numbers<[1], [0], [0], [1], [0, 0, 1, 1], [], []>} : vector<64x128xbf16>, vector<128x128xbf16>, vector<64x128xf32> -> vector<64x128xf32>
    %c0_3 = arith.constant 0 : index
    %c0_4 = arith.constant 0 : index
    %3 = vector.load %arg4[%c0_3, %c0_4] : memref<1x128xf32, #tpu.memory_space<vmem>>, vector<1x128xf32>
    %4 = vector.broadcast %3 : vector<1x128xf32> to vector<64x128xf32>
    %5 = arith.addf %2, %4 : vector<64x128xf32>
    %c0_5 = arith.constant 0 : index
    %c0_6 = arith.constant 0 : index
    %6 = vector.load %arg2[%c0_5, %c0_6] : memref<64x128xbf16, #tpu.memory_space<vmem>>, vector<64x128xbf16>
    %7 = arith.extf %6 : vector<64x128xbf16> to vector<64x128xf32>
    %8 = arith.addf %5, %7 : vector<64x128xf32>
    %9 = vector.shape_cast %8 : vector<64x128xf32> to vector<8x8x128xf32>
    %cst_7 = arith.constant dense<0xFF800000> : vector<8x128xf32>
    %10 = vector.multi_reduction <maximumf>, %9, %cst_7 [1] : vector<8x8x128xf32> to vector<8x128xf32>
    %11 = arith.truncf %10 : vector<8x128xf32> to vector<8x128xbf16>
    %c0_8 = arith.constant 0 : index
    %c0_9 = arith.constant 0 : index
    %12 = vector.load %arg5[%c0_8, %c0_9] : memref<128x128xbf16, #tpu.memory_space<vmem>>, vector<128x128xbf16>
    %cst_10 = arith.constant dense<0.000000e+00> : vector<8x128xf32>
    %13 = tpu.matmul %11, %12, %cst_10 {dimension_numbers = #tpu.dot_dimension_numbers<[1], [0], [0], [1], [0, 0, 1, 1], [], []>} : vector<8x128xbf16>, vector<128x128xbf16>, vector<8x128xf32> -> vector<8x128xf32>
    %c0_11 = arith.constant 0 : index
    %c0_12 = arith.constant 0 : index
    %14 = vector.load %arg6[%c0_11, %c0_12] : memref<1x128xf32, #tpu.memory_space<vmem>>, vector<1x128xf32>
    %15 = vector.broadcast %14 : vector<1x128xf32> to vector<8x128xf32>
    %16 = arith.addf %13, %15 : vector<8x128xf32>
    %c0_13 = arith.constant 0 : index
    %c0_14 = arith.constant 0 : index
    %17 = vector.load %arg7[%c0_13, %c0_14] : memref<8x128xf32, #tpu.memory_space<vmem>>, vector<8x128xf32>
    tpu.vector_store %arg7[%c0_13, %c0_14], %16 {strides = array<i32>} : memref<8x128xf32, #tpu.memory_space<vmem>>, vector<8x128xf32>,
    return
  }
  func.func @transform_0(%arg0: i32) -> (i32, i32) {
    %c0_i32 = arith.constant 0 : i32
    %c0_i32_0 = arith.constant 0 : i32
    return %arg0, %c0_i32 : i32, i32
  }
  func.func @transform_1(%arg0: i32) -> (i32, i32) {
    %c0_i32 = arith.constant 0 : i32
    %c0_i32_0 = arith.constant 0 : i32
    return %arg0, %c0_i32 : i32, i32
  }
  func.func @transform_2(%arg0: i32) -> (i32, i32) {
    %c0_i32 = arith.constant 0 : i32
    %c0_i32_0 = arith.constant 0 : i32
    %c0_i32_1 = arith.constant 0 : i32
    return %c0_i32, %c0_i32_0 : i32, i32
  }
  func.func @transform_3(%arg0: i32) -> (i32, i32) {
    %c0_i32 = arith.constant 0 : i32
    %c0_i32_0 = arith.constant 0 : i32
    %c0_i32_1 = arith.constant 0 : i32
    return %c0_i32, %c0_i32_0 : i32, i32
  }
  func.func @transform_4(%arg0: i32) -> (i32, i32) {
    %c0_i32 = arith.constant 0 : i32
    %c0_i32_0 = arith.constant 0 : i32
    %c0_i32_1 = arith.constant 0 : i32
    return %c0_i32, %c0_i32_0 : i32, i32
  }
  func.func @transform_5(%arg0: i32) -> (i32, i32) {
    %c0_i32 = arith.constant 0 : i32
    %c0_i32_0 = arith.constant 0 : i32
    %c0_i32_1 = arith.constant 0 : i32
    return %c0_i32, %c0_i32_0 : i32, i32
  }
  func.func @transform_6(%arg0: i32) -> (i32, i32) {
    %c0_i32 = arith.constant 0 : i32
    %c0_i32_0 = arith.constant 0 : i32
    return %arg0, %c0_i32 : i32, i32
  }
}

</mosaic_0001>

<llo_original>
// kernel: tpu_custom_call.1
$region0: #{tpu_custom_call.1}
  #allocation0 [shape = 'u32[]', space=smem, size = 0x4, offset = 0x4, fixed_abs, tag = 'smem constant byte address 0x4 - core index']
  #allocation1 [shape = 'u32[144,128]{1,0:T(1,128)}', space=vmem, size = 0x12000, scoped, tag = 'internal scratch']
  %s0 = inlined_call_operand.hbm [shape: bf16[128,128], index: 0, kind: input, shape index: {}]
  %s1 = inlined_call_operand.hbm [shape: bf16[128,128], index: 1, kind: input, shape index: {}]
  %s2 = inlined_call_operand.hbm [shape: bf16[128,128], index: 2, kind: input, shape index: {}]
  %s3 = inlined_call_operand.vmem [shape: f32[1,128], index: 3, kind: input, shape index: {}]
  %s4 = inlined_call_operand.hbm [shape: bf16[128,128], index: 4, kind: input, shape index: {}]
  %s5 = inlined_call_operand.vmem [shape: f32[1,128], index: 5, kind: input, shape index: {}]
  %s6 = inlined_call_operand.hbm [shape: f32[16,128], index: 6, kind: output, shape index: {}]
  %s7 = sld [smem:[#allocation0]]
  $region73: #{tpu_custom_call.1} parent=0
    _
  %s9 = ssub.s32 1, %s7
  %s10 = scalar_select 0, %s9, %s7
  $region1: #{tpu_custom_call.1} parent=0
    #allocation2 [shape = 'u8[32768]{0}', space=vmem, size = 0x8000, scoped, tag = 'input window, operand 0']
    #allocation3 [shape = 's32[2]{0}', space=sflag, size = 0x8, scoped, tag = 'scoped memory for tpu_custom_call.1']
    #allocation4 [shape = 's32[2]{0}', space=sflag, size = 0x8, scoped, tag = 'scoped memory for tpu_custom_call.1']
    #allocation5 [shape = 'u8[32768]{0}', space=vmem, size = 0x8000, scoped, tag = 'input window, operand 1']
    #allocation6 [shape = 's32[2]{0}', space=sflag, size = 0x8, scoped, tag = 'scoped memory for tpu_custom_call.1']
    #allocation7 [shape = 'u8[32768]{0}', space=vmem, size = 0x8000, scoped, tag = 'input window, operand 2, single buffered']
    #allocation8 [shape = 'u8[32768]{0}', space=vmem, size = 0x8000, scoped, tag = 'input window, operand 4, single buffered']
    #allocation9 [shape = 's32[1]{0}', space=sflag, size = 0x4, scoped, tag = 'scoped memory for tpu_custom_call.1']
    #allocation10 [shape = 'u8[8192]{0}', space=vmem, size = 0x2000, scoped, tag = 'output window, operand 0']
    %11 = vsyncpa [#allocation3], 0
    %s12 = scalar_lea.sflag [#allocation3], 1
    %13 = vsyncpa %s12, 0
    %14 = vsyncpa [#allocation6], 0
    %s15 = scalar_lea.sflag [#allocation6], 1
    %16 = vsyncpa %s15, 0
    %17 = vsyncpa [#allocation9], 0
    %18 = vsyncpa [#allocation4], 0
    %s19 = scalar_lea.sflag [#allocation4], 1
    %20 = vsyncpa %s19, 0
    loop: start=0, step=1, limit=4
    $region2: #{tpu_custom_call.1} parent=1 // loop_pre_header
      _
    $region3: #{tpu_custom_call.1} parent=1 // loop_header
      %s22 = sphi 0, %s26
      %p23 = scmp.ge.s32.totalorder %s22, 4
      %s32 = sphi 0, %s34
      %s35 = sphi 0, %s32
      %s36 = sphi 0, %s35
      %s52 = sphi 0, %s36
      %s58 = sphi 0, %s60
      %s61 = sphi 0, %s58
      %s62 = sphi 0, %s61
      %s78 = sphi 0, %s62
      %s82 = sphi 0, %s82
      %s84 = sphi 0, %s82
      %s85 = sphi 0, %s84
      %s99 = sphi 0, %s85
      %s103 = sphi 0, %s103
      %s105 = sphi 0, %s103
      %s106 = sphi 0, %s105
      %s120 = sphi 0, %s106
      %s124 = sphi 0, %s124
      %s126 = sphi 0, %s124
      %s127 = sphi 0, %s126
      %s141 = sphi 0, %s127
      %s145 = sphi 0, %s145
      %s147 = sphi 0, %s145
      %s148 = sphi 0, %s147
      %s162 = sphi 0, %s148
      %s168 = sphi 0, %s170
      %s171 = sphi 0, %s168
      %s172 = sphi 0, %s171
      %s188 = sphi 0, %s172
    $region4: #{tpu_custom_call.1} parent=1 // loop_header_branch
      %25 = sbr.rel (%p23) target = $region8
    $region5: #{tpu_custom_call.1} parent=1 // loop_body
      %s27 = ssub.s32 %s22, 1
      %s28 = ssub.s32 %s22, 2
      %s29 = sadd.s32 %s22, 1
      %s30 = ssub.s32 %s22, %s29
      %p31 = scmp.eq.s32.totalorder %s30, 0
      %s33 = sadd.s32 %s32, 1
      %s34 = scalar_select %p31, %s32, %s33
      %p37 = pneg %p31
      %p38 = scmp.eq.s32.totalorder %s22, 1
      %p39 = por %p37, %p38
      %p40 = scmp.ne.s32.totalorder %s32, %s35
      %p41 = scmp.eq.s32.totalorder %s22, 0
      %p42 = por %p40, %p41
      %p43 = scmp.ne.s32.totalorder %s32, %s35
      %p44 = scmp.eq.s32.totalorder %s27, 1
      %p45 = por %p43, %p44
      %p46 = scmp.ne.s32.totalorder %s35, %s36
      %p47 = scmp.eq.s32.totalorder %s27, 0
      %p48 = por %p46, %p47
      %p49 = scmp.ne.s32.totalorder %s35, %s36
      %p50 = scmp.eq.s32.totalorder %s28, 1
      %p51 = por %p49, %p50
      %p53 = scmp.ne.s32.totalorder %s36, %s52
      %p54 = scmp.eq.s32.totalorder %s28, 0
      %p55 = por %p53, %p54
      %s56 = ssub.s32 %s22, %s29
      %p57 = scmp.eq.s32.totalorder %s56, 0
      %s59 = sadd.s32 %s58, 1
      %s60 = scalar_select %p57, %s58, %s59
      %p63 = pneg %p57
      %p64 = scmp.eq.s32.totalorder %s22, 1
      %p65 = por %p63, %p64
      %p66 = scmp.ne.s32.totalorder %s58, %s61
      %p67 = scmp.eq.s32.totalorder %s22, 0
      %p68 = por %p66, %p67
      %p69 = scmp.ne.s32.totalorder %s58, %s61
      %p70 = scmp.eq.s32.totalorder %s27, 1
      %p71 = por %p69, %p70
      %p72 = scmp.ne.s32.totalorder %s61, %s62
      %p73 = scmp.eq.s32.totalorder %s27, 0
      %p74 = por %p72, %p73
      %p75 = scmp.ne.s32.totalorder %s61, %s62
      %p76 = scmp.eq.s32.totalorder %s28, 1
      %p77 = por %p75, %p76
      %p79 = scmp.ne.s32.totalorder %s62, %s78
      %p80 = scmp.eq.s32.totalorder %s28, 0
      %p81 = por %p79, %p80
      %s83 = sadd.s32 %s82, 1
      %p86 = scmp.eq.s32.totalorder %s22, 1
      %p87 = scmp.ne.s32.totalorder %s82, %s84
      %p88 = scmp.eq.s32.totalorder %s22, 0
      %p89 = por %p87, %p88
      %p90 = scmp.ne.s32.totalorder %s82, %s84
      %p91 = scmp.eq.s32.totalorder %s27, 1
      %p92 = por %p90, %p91
      %p93 = scmp.ne.s32.totalorder %s84, %s85
      %p94 = scmp.eq.s32.totalorder %s27, 0
      %p95 = por %p93, %p94
      %p96 = scmp.ne.s32.totalorder %s84, %s85
      %p97 = scmp.eq.s32.totalorder %s28, 1
      %p98 = por %p96, %p97
      %p100 = scmp.ne.s32.totalorder %s85, %s99
      %p101 = scmp.eq.s32.totalorder %s28, 0
      %p102 = por %p100, %p101
      %s104 = sadd.s32 %s103, 1
      %p107 = scmp.eq.s32.totalorder %s22, 1
      %p108 = scmp.ne.s32.totalorder %s103, %s105
      %p109 = scmp.eq.s32.totalorder %s22, 0
      %p110 = por %p108, %p109
      %p111 = scmp.ne.s32.totalorder %s103, %s105
      %p112 = scmp.eq.s32.totalorder %s27, 1
      %p113 = por %p111, %p112
      %p114 = scmp.ne.s32.totalorder %s105, %s106
      %p115 = scmp.eq.s32.totalorder %s27, 0
      %p116 = por %p114, %p115
      %p117 = scmp.ne.s32.totalorder %s105, %s106
      %p118 = scmp.eq.s32.totalorder %s28, 1
      %p119 = por %p117, %p118
      %p121 = scmp.ne.s32.totalorder %s106, %s120
      %p122 = scmp.eq.s32.totalorder %s28, 0
      %p123 = por %p121, %p122
      %s125 = sadd.s32 %s124, 1
      %p128 = scmp.eq.s32.totalorder %s22, 1
      %p129 = scmp.ne.s32.totalorder %s124, %s126
      %p130 = scmp.eq.s32.totalorder %s22, 0
      %p131 = por %p129, %p130
      %p132 = scmp.ne.s32.totalorder %s124, %s126
      %p133 = scmp.eq.s32.totalorder %s27, 1
      %p134 = por %p132, %p133
      %p135 = scmp.ne.s32.totalorder %s126, %s127
      %p136 = scmp.eq.s32.totalorder %s27, 0
      %p137 = por %p135, %p136
      %p138 = scmp.ne.s32.totalorder %s126, %s127
      %p139 = scmp.eq.s32.totalorder %s28, 1
      %p140 = por %p138, %p139
      %p142 = scmp.ne.s32.totalorder %s127, %s141
      %p143 = scmp.eq.s32.totalorder %s28, 0
      %p144 = por %p142, %p143
      %s146 = sadd.s32 %s145, 1
      %p149 = scmp.eq.s32.totalorder %s22, 1
      %p150 = scmp.ne.s32.totalorder %s145, %s147
      %p151 = scmp.eq.s32.totalorder %s22, 0
      %p152 = por %p150, %p151
      %p153 = scmp.ne.s32.totalorder %s145, %s147
      %p154 = scmp.eq.s32.totalorder %s27, 1
      %p155 = por %p153, %p154
      %p156 = scmp.ne.s32.totalorder %s147, %s148
      %p157 = scmp.eq.s32.totalorder %s27, 0
      %p158 = por %p156, %p157
      %p159 = scmp.ne.s32.totalorder %s147, %s148
      %p160 = scmp.eq.s32.totalorder %s28, 1
      %p161 = por %p159, %p160
      %p163 = scmp.ne.s32.totalorder %s148, %s162
      %p164 = scmp.eq.s32.totalorder %s28, 0
      %p165 = por %p163, %p164
      %s166 = ssub.s32 %s22, %s29
      %p167 = scmp.eq.s32.totalorder %s166, 0
      %s169 = sadd.s32 %s168, 1
      %s170 = scalar_select %p167, %s168, %s169
      %p173 = pneg %p167
      %p174 = scmp.eq.s32.totalorder %s22, 1
      %p175 = por %p173, %p174
      %p176 = scmp.ne.s32.totalorder %s168, %s171
      %p177 = scmp.eq.s32.totalorder %s22, 0
      %p178 = por %p176, %p177
      %p179 = scmp.ne.s32.totalorder %s168, %s171
      %p180 = scmp.eq.s32.totalorder %s27, 1
      %p181 = por %p179, %p180
      %p182 = scmp.ne.s32.totalorder %s171, %s172
      %p183 = scmp.eq.s32.totalorder %s27, 0
      %p184 = por %p182, %p183
      %p185 = scmp.ne.s32.totalorder %s171, %s172
      %p186 = scmp.eq.s32.totalorder %s28, 1
      %p187 = por %p185, %p186
      %p189 = scmp.ne.s32.totalorder %s172, %s188
      %p190 = scmp.eq.s32.totalorder %s28, 0
      %p191 = por %p189, %p190
      %p192 = scmp.le.s32.totalorder 1, %s22
      %p193 = scmp.lt.s32.totalorder %s22, 3
      %p194 = pnand %p192, %p193
      %p195 = pneg %p194
      // Predicated region
      $region9: #{tpu_custom_call.1} parent=5 // pred_check
        _
      $region10: #{tpu_custom_call.1} parent=5 // pred_check_branch
        %197 = sbr.rel (%p194) target = $region12
      $region11: #{tpu_custom_call.1} parent=5 // pred_region
        %s198 = ssub.s32 %s22, 1
        // Predicated region
        $region13: #{tpu_custom_call.1} parent=11 // pred_check
          %p199 = pneg %p95
        $region14: #{tpu_custom_call.1} parent=11 // pred_check_branch
          %201 = sbr.rel (%p199) target = $region16
        $region15: #{tpu_custom_call.1} parent=11 // pred_region
          %s203 = ssub.s32 1024, 1024
          %204 = vsyncadd [#allocation6], %s203
          %s205 = sshll.u32 [#allocation7], 4
          %s206 = int_to_ptr.vmem [resolvable:$true] %s205
          %211 = dma.hbm_to_vmem [thread:$0]  %s2, 1024, %s206, [#allocation6], 64, 64, 4
        $region16: #{tpu_custom_call.1} parent=11 // pred_fallthru
          _
        // Predicated region
        $region17: #{tpu_custom_call.1} parent=11 // pred_check
          %p212 = pneg %p116
        $region18: #{tpu_custom_call.1} parent=11 // pred_check_branch
          %214 = sbr.rel (%p212) target = $region20
        $region19: #{tpu_custom_call.1} parent=11 // pred_region
          _
        $region20: #{tpu_custom_call.1} parent=11 // pred_fallthru
          _
        // Predicated region
        $region21: #{tpu_custom_call.1} parent=11 // pred_check
          %p215 = pneg %p137
        $region22: #{tpu_custom_call.1} parent=11 // pred_check_branch
          %217 = sbr.rel (%p215) target = $region24
        $region23: #{tpu_custom_call.1} parent=11 // pred_region
          %s219 = ssub.s32 1024, 1024
          %220 = vsyncadd [#allocation9], %s219
          %s221 = sshll.u32 [#allocation8], 4
          %s222 = int_to_ptr.vmem [resolvable:$true] %s221
          %227 = dma.hbm_to_vmem [thread:$0]  %s4, 1024, %s222, [#allocation9], 64, 64, 4
        $region24: #{tpu_custom_call.1} parent=11 // pred_fallthru
          _
        // Predicated region
        $region25: #{tpu_custom_call.1} parent=11 // pred_check
          %p228 = pneg %p158
        $region26: #{tpu_custom_call.1} parent=11 // pred_check_branch
          %230 = sbr.rel (%p228) target = $region28
        $region27: #{tpu_custom_call.1} parent=11 // pred_region
          _
        $region28: #{tpu_custom_call.1} parent=11 // pred_fallthru
          _
      $region12: #{tpu_custom_call.1} parent=5 // pred_fallthru
        _
      %p231 = scmp.lt.s32.totalorder %s22, 2
      // Predicated region
      $region29: #{tpu_custom_call.1} parent=5 // pred_check
        %p232 = pneg %p231
      $region30: #{tpu_custom_call.1} parent=5 // pred_check_branch
        %234 = sbr.rel (%p232) target = $region32
      $region31: #{tpu_custom_call.1} parent=5 // pred_region
        // Predicated region
        $region33: #{tpu_custom_call.1} parent=31 // pred_check
          %p235 = pneg %p42
        $region34: #{tpu_custom_call.1} parent=31 // pred_check_branch
          %237 = sbr.rel (%p235) target = $region36
        $region35: #{tpu_custom_call.1} parent=31 // pred_region
          %s238 = sand.u32 %s32, 1
          %s239 = scalar_lea.sflag [#allocation3], %s238
          %s240 = sand.u32 %s32, 1
          %s241 = smul.addr %s240, 32
          %s242 = scalar_lea.vmem [#allocation2], %s241
          %s243 = smul.u32 8, %s22
          %s245 = ssub.s32 512, 512
          %246 = vsyncadd %s239, %s245
          %s247 = smul.addr %s243, 64
          %s248 = scalar_lea.hbm %s0, %s247
          %s249 = sshll.u32 %s242, 4
          %s250 = int_to_ptr.vmem [resolvable:$true] %s249
          %255 = dma.hbm_to_vmem [thread:$0]  %s248, 512, %s250, %s239, 64, 64, 4
        $region36: #{tpu_custom_call.1} parent=31 // pred_fallthru
          _
        // Predicated region
        $region37: #{tpu_custom_call.1} parent=31 // pred_check
          %p256 = pneg %p68
        $region38: #{tpu_custom_call.1} parent=31 // pred_check_branch
          %258 = sbr.rel (%p256) target = $region40
        $region39: #{tpu_custom_call.1} parent=31 // pred_region
          %s259 = sand.u32 %s22, 1
          %s260 = scalar_lea.sflag [#allocation6], %s259
          %s261 = sand.u32 %s58, 1
          %s262 = smul.addr %s261, 32
          %s263 = scalar_lea.vmem [#allocation5], %s262
          %s264 = smul.u32 8, %s22
          %s266 = ssub.s32 512, 512
          %267 = vsyncadd %s260, %s266
          %s268 = smul.addr %s264, 64
          %s269 = scalar_lea.hbm %s1, %s268
          %s270 = sshll.u32 %s263, 4
          %s271 = int_to_ptr.vmem [resolvable:$true] %s270
          %276 = dma.hbm_to_vmem [thread:$0]  %s269, 512, %s271, %s260, 64, 64, 4
        $region40: #{tpu_custom_call.1} parent=31 // pred_fallthru
          _
      $region32: #{tpu_custom_call.1} parent=5 // pred_fallthru
        _
      %p277 = scmp.le.s32.totalorder 1, %s22
      %p278 = scmp.lt.s32.totalorder %s22, 3
      %p279 = pnand %p277, %p278
      %p280 = pneg %p279
      // Predicated region
      $region41: #{tpu_custom_call.1} parent=5 // pred_check
        _
      $region42: #{tpu_custom_call.1} parent=5 // pred_check_branch
        %282 = sbr.rel (%p279) target = $region44
      $region43: #{tpu_custom_call.1} parent=5 // pred_region
        %s283 = ssub.s32 %s22, 1
        %s284 = sand.u32 %s35, 1
        %s285 = scalar_lea.sflag [#allocation3], %s284
        %s286 = sand.u32 %s35, 1
        %s287 = smul.addr %s286, 32
        %s288 = scalar_lea.vmem [#allocation2], %s287
        // Predicated region
        $region45: #{tpu_custom_call.1} parent=43 // pred_check
          %p289 = pneg %p48
        $region46: #{tpu_custom_call.1} parent=43 // pred_check_branch
          %291 = sbr.rel (%p289) target = $region48
        $region47: #{tpu_custom_call.1} parent=43 // pred_region
          %292 = dma.done %s285, 512
        $region48: #{tpu_custom_call.1} parent=43 // pred_fallthru
          _
        %s293 = sand.u32 %s27, 1
        %s294 = scalar_lea.sflag [#allocation6], %s293
        %s295 = sand.u32 %s61, 1
        %s296 = smul.addr %s295, 32
        %s297 = scalar_lea.vmem [#allocation5], %s296
        // Predicated region
        $region49: #{tpu_custom_call.1} parent=43 // pred_check
          %p298 = pneg %p74
        $region50: #{tpu_custom_call.1} parent=43 // pred_check_branch
          %300 = sbr.rel (%p298) target = $region52
        $region51: #{tpu_custom_call.1} parent=43 // pred_region
          %301 = dma.done %s294, 512
        $region52: #{tpu_custom_call.1} parent=43 // pred_fallthru
          _
        // Predicated region
        $region53: #{tpu_custom_call.1} parent=43 // pred_check
          %p302 = pneg %p95
        $region54: #{tpu_custom_call.1} parent=43 // pred_check_branch
          %304 = sbr.rel (%p302) target = $region56
        $region55: #{tpu_custom_call.1} parent=43 // pred_region
          %305 = dma.done [#allocation6], 1024
        $region56: #{tpu_custom_call.1} parent=43 // pred_fallthru
          _
        // Predicated region
        $region57: #{tpu_custom_call.1} parent=43 // pred_check
          %p306 = pneg %p137
        $region58: #{tpu_custom_call.1} parent=43 // pred_check_branch
          %308 = sbr.rel (%p306) target = $region60
        $region59: #{tpu_custom_call.1} parent=43 // pred_region
          %309 = dma.done [#allocation9], 1024
        $region60: #{tpu_custom_call.1} parent=43 // pred_fallthru
          _
        %s310 = sand.u32 %s35, 1
        %s311 = scalar_lea.sflag [#allocation3], %s310
        %s312 = sand.u32 %s35, 1
        %s313 = smul.addr %s312, 32
        %s314 = scalar_lea.vmem [#allocation2], %s313
        %p315 = pneg %p48
        %p316 = pneg %p45
        %s317 = sand.u32 %s27, 1
        %s318 = scalar_lea.sflag [#allocation6], %s317
        %s319 = sand.u32 %s61, 1
        %s320 = smul.addr %s319, 32
        %s321 = scalar_lea.vmem [#allocation5], %s320
        %p322 = pneg %p74
        %p323 = pneg %p71
        %p324 = pneg %p95
        %p325 = pneg %p92
        %p326 = pneg %p116
        %p327 = pneg %p113
        %p328 = pneg %p137
        %p329 = pneg %p134
        %p330 = pneg %p158
        %p331 = pneg %p155
        %p332 = pneg %p184
        %p333 = pneg %p181
        %s334 = sand.u32 %s171, 1
        %s335 = scalar_lea.sflag [#allocation4], %s334
        %s336 = sand.u32 %s171, 1
        %s337 = smul.addr %s336, 8
        %s338 = scalar_lea.vmem [#allocation10], %s337
        %s339 = smul.u32 8, %s27
        %s340 = smul.u32 8, %s27
        %v342 = vld [vmem:[%s288] sm:$0xf]
        %v343 = vld [vmem:[%s288 + $0x4] sm:$0xf]
        %v344 = vld [vmem:[%s288 + $0x8] sm:$0xf]
        %v345 = vld [vmem:[%s288 + $0xc] sm:$0xf]
        %v346 = vld [vmem:[%s288 + $0x10] sm:$0xf]
        %v347 = vld [vmem:[%s288 + $0x14] sm:$0xf]
        %v348 = vld [vmem:[%s288 + $0x18] sm:$0xf]
        %v349 = vld [vmem:[%s288 + $0x1c] sm:$0xf]
        %v350 = vld [vmem:[#allocation7] sm:$0xf]
        %v351 = vld [vmem:[#allocation7 + $0x4] sm:$0xf]
        %v352 = vld [vmem:[#allocation7 + $0x8] sm:$0xf]
        %v353 = vld [vmem:[#allocation7 + $0xc] sm:$0xf]
        %v354 = vld [vmem:[#allocation7 + $0x10] sm:$0xf]
        %v355 = vld [vmem:[#allocation7 + $0x14] sm:$0xf]
        %v356 = vld [vmem:[#allocation7 + $0x18] sm:$0xf]
        %v357 = vld [vmem:[#allocation7 + $0x1c] sm:$0xf]
        %v358 = vld [vmem:[#allocation7 + $0x20] sm:$0xf]
        %v359 = vld [vmem:[#allocation7 + $0x24] sm:$0xf]
        %v360 = vld [vmem:[#allocation7 + $0x28] sm:$0xf]
        %v361 = vld [vmem:[#allocation7 + $0x2c] sm:$0xf]
        %v362 = vld [vmem:[#allocation7 + $0x30] sm:$0xf]
        %v363 = vld [vmem:[#allocation7 + $0x34] sm:$0xf]
        %v364 = vld [vmem:[#allocation7 + $0x38] sm:$0xf]
        %v365 = vld [vmem:[#allocation7 + $0x3c] sm:$0xf]
        %v366 = vld [vmem:[%s3] sm:$0x1]
        %v368 = vlaneseq
        %v369 = vshrl.u32 %v368, 7
        %v370 = vsub.s32 0, %v369
        %v371 = vrot.slane %v366, %v370
        %v381 = vunpack.c.l.b16 %v342
        %v382 = vunpack.c.l.b16 %v343
        %v383 = vunpack.c.l.b16 %v344
        %v384 = vunpack.c.l.b16 %v345
        %v385 = vunpack.c.l.b16 %v346
        %v386 = vunpack.c.l.b16 %v347
        %v387 = vunpack.c.l.b16 %v348
        %v388 = vunpack.c.l.b16 %v349
        %v389 = vpack.c.b16 %v382, %v381
        %v390 = vpack.c.b16 %v384, %v383
        %v391 = vpack.c.b16 %v386, %v385
        %v392 = vpack.c.b16 %v388, %v387
        %v413 = vunpack.c.l.b16 %v350
        %v414 = vunpack.c.l.b16 %v351
        %v415 = vunpack.c.l.b16 %v352
        %v416 = vunpack.c.l.b16 %v353
        %v417 = vunpack.c.l.b16 %v354
        %v418 = vunpack.c.l.b16 %v355
        %v419 = vunpack.c.l.b16 %v356
        %v420 = vunpack.c.l.b16 %v357
        %v421 = vunpack.c.l.b16 %v358
        %v422 = vunpack.c.l.b16 %v359
        %v423 = vunpack.c.l.b16 %v360
        %v424 = vunpack.c.l.b16 %v361
        %v425 = vunpack.c.l.b16 %v362
        %v426 = vunpack.c.l.b16 %v363
        %v427 = vunpack.c.l.b16 %v364
        %v428 = vunpack.c.l.b16 %v365
        %v429 = vpack.c.b16 %v414, %v413
        %v430 = vpack.c.b16 %v416, %v415
        %v431 = vpack.c.b16 %v418, %v417
        %v432 = vpack.c.b16 %v420, %v419
        %v433 = vpack.c.b16 %v422, %v421
        %v434 = vpack.c.b16 %v424, %v423
        %v435 = vpack.c.b16 %v426, %v425
        %v436 = vpack.c.b16 %v428, %v427
        %445 = vmatprep.subr.bf16.mxu0 0
        %446 = vmatpush1.bf16.msra.mxu0 %v429
        %447 = vmatprep.subr.bf16.mxu0 0
        %448 = vmatpush1.bf16.msra.mxu0 %v430
        %449 = vmatprep.subr.bf16.mxu0 0
        %450 = vmatpush1.bf16.msra.mxu0 %v431
        %451 = vmatprep.subr.bf16.mxu0 0
        %452 = vmatpush1.bf16.msra.mxu0 %v432
        %453 = vmatprep.subr.bf16.mxu0 0
        %454 = vmatpush1.bf16.msra.mxu0 %v433
        %455 = vmatprep.subr.bf16.mxu0 0
        %456 = vmatpush1.bf16.msra.mxu0 %v434
        %457 = vmatprep.subr.bf16.mxu0 0
        %458 = vmatpush1.bf16.msra.mxu0 %v435
        %459 = vmatprep.subr.bf16.mxu0 0
        %460 = vmatpush1.bf16.msra.mxu0 %v436
        %461 = vmatprep.subr.bf16.mxu0 0
        %462 = vmatpush1.bf16.msra.mxu0 0
        %463 = vmatprep.subr.bf16.mxu0 0
        %464 = vmatpush1.bf16.msra.mxu0 0
        %465 = vmatprep.subr.bf16.mxu0 0
        %466 = vmatpush1.bf16.msra.mxu0 0
        %467 = vmatprep.subr.bf16.mxu0 0
        %468 = vmatpush1.bf16.msra.mxu0 0
        %469 = vmatprep.subr.bf16.mxu0 0
        %470 = vmatpush1.bf16.msra.mxu0 0
        %471 = vmatprep.subr.bf16.mxu0 0
        %472 = vmatpush1.bf16.msra.mxu0 0
        %473 = vmatprep.subr.bf16.mxu0 0
        %474 = vmatpush1.bf16.msra.mxu0 0
        %475 = vmatprep.subr.bf16.mxu0 0
        %476 = vmatpush1.bf16.msra.mxu0 0
        %477 = vmatprep.mubr.bf16.mxu0 0
        %478 = vmatmul.mubr.bf16.gmra.mrb[0].mxu0 %v389
        %v479 = vpop.f32.mrb[0].mxu0
        %v480 = vadd.f32 %v371, %v479
        %v481 = vpop.f32.mrb[0].mxu0
        %v482 = vpop.f32.mrb[0].mxu0
        %v483 = vadd.f32 %v371, %v482
        %v484 = vpop.f32.mrb[0].mxu0
        %485 = vmatprep.mubr.bf16.mxu0 0
        %486 = vmatmul.mubr.bf16.gmra.mrb[0].mxu0 %v390
        %v487 = vpop.f32.mrb[0].mxu0
        %v488 = vadd.f32 %v371, %v487
        %v489 = vpop.f32.mrb[0].mxu0
        %v490 = vpop.f32.mrb[0].mxu0
        %v491 = vadd.f32 %v371, %v490
        %v492 = vpop.f32.mrb[0].mxu0
        %493 = vmatprep.mubr.bf16.mxu0 0
        %494 = vmatmul.mubr.bf16.gmra.mrb[0].mxu0 %v391
        %v495 = vpop.f32.mrb[0].mxu0
        %v496 = vadd.f32 %v371, %v495
        %v497 = vpop.f32.mrb[0].mxu0
        %v498 = vpop.f32.mrb[0].mxu0
        %v499 = vadd.f32 %v371, %v498
        %v500 = vpop.f32.mrb[0].mxu0
        %501 = vmatprep.mubr.bf16.mxu0 0
        %502 = vmatmul.mubr.bf16.gmra.mrb[0].mxu0 %v392
        %v503 = vpop.f32.mrb[0].mxu0
        %v504 = vadd.f32 %v371, %v503
        %v505 = vpop.f32.mrb[0].mxu0
        %v506 = vpop.f32.mrb[0].mxu0
        %v507 = vadd.f32 %v371, %v506
        %v508 = vpop.f32.mrb[0].mxu0
        %509 = vdwg.mxu0
        %v510 = vld [vmem:[%s297] sm:$0xf]
        %v511 = vld [vmem:[%s297 + $0x4] sm:$0xf]
        %v512 = vld [vmem:[%s297 + $0x8] sm:$0xf]
        %v513 = vld [vmem:[%s297 + $0xc] sm:$0xf]
        %v514 = vld [vmem:[%s297 + $0x10] sm:$0xf]
        %v515 = vld [vmem:[%s297 + $0x14] sm:$0xf]
        %v516 = vld [vmem:[%s297 + $0x18] sm:$0xf]
        %v517 = vld [vmem:[%s297 + $0x1c] sm:$0xf]
        %v518 = vunpack.c.l.bf16 %v510
        %v519 = vunpack.c.l.bf16 %v511
        %v520 = vunpack.c.l.bf16 %v512
        %v521 = vunpack.c.l.bf16 %v513
        %v522 = vunpack.c.l.bf16 %v514
        %v523 = vunpack.c.l.bf16 %v515
        %v524 = vunpack.c.l.bf16 %v516
        %v525 = vunpack.c.l.bf16 %v517
        %v526 = vadd.f32 %v480, %v518
        %v527 = vadd.f32 %v483, %v519
        %v528 = vadd.f32 %v488, %v520
        %v529 = vadd.f32 %v491, %v521
        %v530 = vadd.f32 %v496, %v522
        %v531 = vadd.f32 %v499, %v523
        %v532 = vadd.f32 %v504, %v524
        %v533 = vadd.f32 %v507, %v525
        %v534 = vrot.slane %v526, 4
        %v535 = vmax.f32 %v526, %v534
        %v536 = vrot.slane %v535, 2
        %v537 = vmax.f32 %v535, %v536
        %v538 = vrot.slane %v537, 1
        %v539 = vmax.f32 %v537, %v538
        %v540 = vrot.slane %v527, 4
        %v541 = vmax.f32 %v527, %v540
        %v542 = vrot.slane %v541, 2
        %v543 = vmax.f32 %v541, %v542
        %v544 = vrot.slane %v543, 1
        %v545 = vmax.f32 %v543, %v544
        %v546 = vrot.slane %v528, 4
        %v547 = vmax.f32 %v528, %v546
        %v548 = vrot.slane %v547, 2
        %v549 = vmax.f32 %v547, %v548
        %v550 = vrot.slane %v549, 1
        %v551 = vmax.f32 %v549, %v550
        %v552 = vrot.slane %v529, 4
        %v553 = vmax.f32 %v529, %v552
        %v554 = vrot.slane %v553, 2
        %v555 = vmax.f32 %v553, %v554
        %v556 = vrot.slane %v555, 1
        %v557 = vmax.f32 %v555, %v556
        %v558 = vrot.slane %v530, 4
        %v559 = vmax.f32 %v530, %v558
        %v560 = vrot.slane %v559, 2
        %v561 = vmax.f32 %v559, %v560
        %v562 = vrot.slane %v561, 1
        %v563 = vmax.f32 %v561, %v562
        %v564 = vrot.slane %v531, 4
        %v565 = vmax.f32 %v531, %v564
        %v566 = vrot.slane %v565, 2
        %v567 = vmax.f32 %v565, %v566
        %v568 = vrot.slane %v567, 1
        %v569 = vmax.f32 %v567, %v568
        %v570 = vrot.slane %v532, 4
        %v571 = vmax.f32 %v532, %v570
        %v572 = vrot.slane %v571, 2
        %v573 = vmax.f32 %v571, %v572
        %v574 = vrot.slane %v573, 1
        %v575 = vmax.f32 %v573, %v574
        %v576 = vrot.slane %v533, 4
        %v577 = vmax.f32 %v533, %v576
        %v578 = vrot.slane %v577, 2
        %v579 = vmax.f32 %v577, %v578
        %v580 = vrot.slane %v579, 1
        %v581 = vmax.f32 %v579, %v580
        %v582 = vpack.c.bf16 %v539, %v539
        %v583 = vpack.c.bf16 %v545, %v545
        %v584 = vpack.c.bf16 %v551, %v551
        %v585 = vpack.c.bf16 %v557, %v557
        %v586 = vpack.c.bf16 %v563, %v563
        %v587 = vpack.c.bf16 %v569, %v569
        %v588 = vpack.c.bf16 %v575, %v575
        %v589 = vpack.c.bf16 %v581, %v581
        %v590 = vld [vmem:[#allocation8] sm:$0xf]
        %v591 = vld [vmem:[#allocation8 + $0x4] sm:$0xf]
        %v592 = vld [vmem:[#allocation8 + $0x8] sm:$0xf]
        %v593 = vld [vmem:[#allocation8 + $0xc] sm:$0xf]
        %v594 = vld [vmem:[#allocation8 + $0x10] sm:$0xf]
        %v595 = vld [vmem:[#allocation8 + $0x14] sm:$0xf]
        %v596 = vld [vmem:[#allocation8 + $0x18] sm:$0xf]
        %v597 = vld [vmem:[#allocation8 + $0x1c] sm:$0xf]
        %v598 = vld [vmem:[#allocation8 + $0x20] sm:$0xf]
        %v599 = vld [vmem:[#allocation8 + $0x24] sm:$0xf]
        %v600 = vld [vmem:[#allocation8 + $0x28] sm:$0xf]
        %v601 = vld [vmem:[#allocation8 + $0x2c] sm:$0xf]
        %v602 = vld [vmem:[#allocation8 + $0x30] sm:$0xf]
        %v603 = vld [vmem:[#allocation8 + $0x34] sm:$0xf]
        %v604 = vld [vmem:[#allocation8 + $0x38] sm:$0xf]
        %v605 = vld [vmem:[#allocation8 + $0x3c] sm:$0xf]
        %v606 = vld [vmem:[%s5] sm:$0x1]
        %v608 = vlaneseq
        %v609 = vshrl.u32 %v608, 7
        %v610 = vsub.s32 0, %v609
        %v611 = vrot.slane %v606, %v610
        %v621 = vunpack.c.l.b16 %v582
        %v622 = vunpack.c.l.b16 %v583
        %v623 = vunpack.c.l.b16 %v584
        %v624 = vunpack.c.l.b16 %v585
        %v625 = vunpack.c.l.b16 %v586
        %v626 = vunpack.c.l.b16 %v587
        %v627 = vunpack.c.l.b16 %v588
        %v628 = vunpack.c.l.b16 %v589
        %vm629 = vcmask 1041409
        %v630 = vsel %vm629, %v622, %v621
        %vm631 = vcmask 1042434
        %v632 = vsel %vm631, %v623, %v630
        %vm633 = vcmask 1043459
        %v634 = vsel %vm633, %v624, %v632
        %vm635 = vcmask 1044484
        %v636 = vsel %vm635, %v625, %v634
        %vm637 = vcmask 1045509
        %v638 = vsel %vm637, %v626, %v636
        %vm639 = vcmask 1046534
        %v640 = vsel %vm639, %v627, %v638
        %vm641 = vcmask 1047559
        %v642 = vsel %vm641, %v628, %v640
        %v643 = vpack.c.b16 %v642, %v642
        %v661 = vunpack.c.l.b16 %v590
        %v662 = vunpack.c.l.b16 %v591
        %v663 = vunpack.c.l.b16 %v592
        %v664 = vunpack.c.l.b16 %v593
        %v665 = vunpack.c.l.b16 %v594
        %v666 = vunpack.c.l.b16 %v595
        %v667 = vunpack.c.l.b16 %v596
        %v668 = vunpack.c.l.b16 %v597
        %v669 = vunpack.c.l.b16 %v598
        %v670 = vunpack.c.l.b16 %v599
        %v671 = vunpack.c.l.b16 %v600
        %v672 = vunpack.c.l.b16 %v601
        %v673 = vunpack.c.l.b16 %v602
        %v674 = vunpack.c.l.b16 %v603
        %v675 = vunpack.c.l.b16 %v604
        %v676 = vunpack.c.l.b16 %v605
        %v677 = vpack.c.b16 %v662, %v661
        %v678 = vpack.c.b16 %v664, %v663
        %v679 = vpack.c.b16 %v666, %v665
        %v680 = vpack.c.b16 %v668, %v667
        %v681 = vpack.c.b16 %v670, %v669
        %v682 = vpack.c.b16 %v672, %v671
        %v683 = vpack.c.b16 %v674, %v673
        %v684 = vpack.c.b16 %v676, %v675
        %693 = vmatprep.subr.bf16.mxu0 0
        %694 = vmatpush1.bf16.msra.mxu0 %v677
        %695 = vmatprep.subr.bf16.mxu0 0
        %696 = vmatpush1.bf16.msra.mxu0 %v678
        %697 = vmatprep.subr.bf16.mxu0 0
        %698 = vmatpush1.bf16.msra.mxu0 %v679
        %699 = vmatprep.subr.bf16.mxu0 0
        %700 = vmatpush1.bf16.msra.mxu0 %v680
        %701 = vmatprep.subr.bf16.mxu0 0
        %702 = vmatpush1.bf16.msra.mxu0 %v681
        %703 = vmatprep.subr.bf16.mxu0 0
        %704 = vmatpush1.bf16.msra.mxu0 %v682
        %705 = vmatprep.subr.bf16.mxu0 0
        %706 = vmatpush1.bf16.msra.mxu0 %v683
        %707 = vmatprep.subr.bf16.mxu0 0
        %708 = vmatpush1.bf16.msra.mxu0 %v684
        %709 = vmatprep.subr.bf16.mxu0 0
        %710 = vmatpush1.bf16.msra.mxu0 0
        %711 = vmatprep.subr.bf16.mxu0 0
        %712 = vmatpush1.bf16.msra.mxu0 0
        %713 = vmatprep.subr.bf16.mxu0 0
        %714 = vmatpush1.bf16.msra.mxu0 0
        %715 = vmatprep.subr.bf16.mxu0 0
        %716 = vmatpush1.bf16.msra.mxu0 0
        %717 = vmatprep.subr.bf16.mxu0 0
        %718 = vmatpush1.bf16.msra.mxu0 0
        %719 = vmatprep.subr.bf16.mxu0 0
        %720 = vmatpush1.bf16.msra.mxu0 0
        %721 = vmatprep.subr.bf16.mxu0 0
        %722 = vmatpush1.bf16.msra.mxu0 0
        %723 = vmatprep.subr.bf16.mxu0 0
        %724 = vmatpush1.bf16.msra.mxu0 0
        %725 = vmatprep.mubr.bf16.mxu0 0
        %726 = vmatmul.mubr.bf16.gmra.mrb[0].mxu0 %v643
        %v727 = vpop.f32.mrb[0].mxu0
        %v728 = vadd.f32 %v611, %v727
        %v729 = vpop.f32.mrb[0].mxu0
        %v730 = vpop.f32.mrb[0].mxu0
        %v731 = vpop.f32.mrb[0].mxu0
        %732 = vdwg.mxu0
        %733 = vst [vmem:[%s338] sm:$0xff] %v728
        %s734 = sand.u32 %s171, 1
        %s735 = scalar_lea.sflag [#allocation4], %s734
        %s736 = sand.u32 %s171, 1
        %s737 = smul.addr %s736, 8
        %s738 = scalar_lea.vmem [#allocation10], %s737
        // Predicated region
        $region61: #{tpu_custom_call.1} parent=43 // pred_check
          %p739 = pneg %p181
        $region62: #{tpu_custom_call.1} parent=43 // pred_check_branch
          %741 = sbr.rel (%p739) target = $region64
        $region63: #{tpu_custom_call.1} parent=43 // pred_region
          %s743 = ssub.s32 128, 128
          %744 = vsyncadd %s735, %s743
          %s745 = smul.addr %s27, 128
          %s746 = scalar_lea.hbm %s6, %s745
          %s748 = sshll.u32 %s738, 4
          %s749 = int_to_ptr.vmem [resolvable:$true] %s748
          %751 = dma.vmem_to_hbm [thread:$0]  %s749, 128, %s746, %s735
        $region64: #{tpu_custom_call.1} parent=43 // pred_fallthru
          _
      $region44: #{tpu_custom_call.1} parent=5 // pred_fallthru
        _
      %p752 = scmp.le.s32.totalorder 2, %s22
      // Predicated region
      $region65: #{tpu_custom_call.1} parent=5 // pred_check
        %p753 = pneg %p752
      $region66: #{tpu_custom_call.1} parent=5 // pred_check_branch
        %755 = sbr.rel (%p753) target = $region68
      $region67: #{tpu_custom_call.1} parent=5 // pred_region
        %s756 = ssub.s32 %s22, 2
        // Predicated region
        $region69: #{tpu_custom_call.1} parent=67 // pred_check
          %p757 = pneg %p187
        $region70: #{tpu_custom_call.1} parent=67 // pred_check_branch
          %759 = sbr.rel (%p757) target = $region72
        $region71: #{tpu_custom_call.1} parent=67 // pred_region
          %s760 = sand.u32 %s172, 1
          %s761 = scalar_lea.sflag [#allocation4], %s760
          %s762 = sand.u32 %s172, 1
          %s763 = smul.addr %s762, 8
          %s764 = scalar_lea.vmem [#allocation10], %s763
          %765 = dma.done %s761, 128
        $region72: #{tpu_custom_call.1} parent=67 // pred_fallthru
          _
      $region68: #{tpu_custom_call.1} parent=5 // pred_fallthru
        _
    $region6: #{tpu_custom_call.1} parent=1 // loop_footer
      %s26 = sadd.s32 1, %s22
    $region7: #{tpu_custom_call.1} parent=1 // loop_footer_branch
      %21 = sbr.rel target = $region3
    $region8: #{tpu_custom_call.1} parent=1 // loop_exit
      _
    %766 = vsyncpa [#allocation3], 1
    %s767 = scalar_lea.sflag [#allocation3], 1
    %768 = vsyncpa %s767, 1
    %769 = vsyncpa [#allocation6], 1
    %s770 = scalar_lea.sflag [#allocation6], 1
    %771 = vsyncpa %s770, 1
    %772 = vsyncpa [#allocation9], 1
    %773 = vsyncpa [#allocation4], 1
    %s774 = scalar_lea.sflag [#allocation4], 1
    %775 = vsyncpa %s774, 1

</llo_original>
